<compile_context>
chip_gen: v5e
topology: v5e:2x2
jax: 0.10.0
libtpu: 0.0.40
codegen_flags: <defaults>
</compile_context>

<pallas_src>
import functools

import jax
import jax.numpy as jnp
import numpy as np
from jax.experimental import pallas as pl
from jax.experimental.pallas import tpu as pltpu


def gat_kernel(nb_ref, wt_ref, bw_ref, a1_ref, a2_ref, ab_ref, o_ref, *, inv_h):
    nb = nb_ref[...]          # (N, E)      neighborhood features (row 0 = self)
    wt = wt_ref[...]          # (E, H*E)    stacked, pre-transposed W (all heads)
    bw = bw_ref[...]          # (1, H*E)    stacked linear bias
    a1 = a1_ref[...]          # (H*E, H)    block-diag `a` weight acting on W(h)
    a2 = a2_ref[...]          # (H*E, H)    block-diag `a` weight acting on W(nb)
    ab = ab_ref[...]          # (1, H)      `a` bias

    # All heads at once on the MXU: (N, E) @ (E, H*E).
    wnb = jnp.dot(nb, wt, preferred_element_type=jnp.float32) + bw      # (N, H*E)
    wh = wnb[0:1, :]          # W(h): nb row 0 is h = f[x]               # (1, H*E)

    # Per-head attention logits as MXU matmuls against block-diagonal weights:
    #   logit[i, hd] = <W(nb_i), a2_hd> + <W(h), a1_hd> + ab_hd
    logit = (jnp.dot(wnb, a2, preferred_element_type=jnp.float32)
             + jnp.dot(wh, a1, preferred_element_type=jnp.float32)
             + ab)                                                       # (N, H)
    at = jnp.where(logit > 0, logit, 0.2 * logit)                        # leaky_relu(0.2)

    # mean over heads of sum_i at[i, hd] * nb_i
    #   == (1/H) * sum_i (sum_hd at[i, hd]) * nb_i
    at_sum = jnp.sum(at, axis=1, keepdims=True)                          # (N, 1)
    o_ref[...] = jnp.sum(at_sum * nb, axis=0, keepdims=True) * inv_h     # (1, E)


def gat_forward(nb, W, bw, aw, ab):
    """nb: (N, E) f32; W: (H, E, E); bw: (H, E); aw: (H, 2E); ab: (H,)."""
    H, E, _ = W.shape
    f32 = jnp.float32

    # Stack heads along the lane axis with the contraction dim leading so the
    # kernel never transposes:  wt_all[:, hd*E:(hd+1)*E] = W[hd].T
    wt_all = jnp.transpose(W, (2, 0, 1)).reshape(E, H * E).astype(f32)
    bw_all = bw.reshape(1, H * E).astype(f32)

    # Block-diagonal attention weights: a*_blk[hd*E + j, hd] = aw[hd, ...+j]
    eye = jnp.eye(H, dtype=f32)
    a1_blk = (aw[:, :E].astype(f32)[:, :, None] * eye[:, None, :]).reshape(H * E, H)
    a2_blk = (aw[:, E:].astype(f32)[:, :, None] * eye[:, None, :]).reshape(H * E, H)
    ab_row = ab.reshape(1, H).astype(f32)

    vmem = pl.BlockSpec(memory_space=pltpu.MemorySpace.VMEM)
    # TODO(synk): for real workloads, batch many neighborhoods per call
    # (lane-dense (B, >=128) output slab + a "parallel" batch grid axis for
    # v7x's two TensorCores); the module's forward only processes one node x,
    # so the (1, E) output contract is kept here.
    return pl.pallas_call(
        functools.partial(gat_kernel, inv_h=1.0 / H),
        out_shape=jax.ShapeDtypeStruct((1, E), f32),
        in_specs=[vmem] * 6,
        out_specs=vmem,
    )(nb.astype(f32), wt_all, bw_all, a1_blk, a2_blk, ab_row)


def gat_reference(nb, W, bw, aw, ab):
    """Pure-JAX reference mirroring the PyTorch semantics."""
    H, E, _ = W.shape
    outs = []
    for hd in range(H):
        wnb = nb @ W[hd].T + bw[hd]                      # self.w(nb)
        wh = wnb[0:1, :]                                 # self.w(h) (repeated)
        cnb = jnp.concatenate(
            [jnp.broadcast_to(wh, wnb.shape), wnb], axis=1)  # (N, 2E)
        logit = cnb @ aw[hd].reshape(2 * E, 1) + ab[hd]      # self.a(cnb)
        at = jnp.where(logit > 0, logit, 0.2 * logit)
        outs.append(jnp.sum(at * nb, axis=0, keepdims=True))
    return jnp.mean(jnp.concatenate(outs, axis=0), axis=0, keepdims=True)


if __name__ == "__main__":
    E = 32          # emb_size
    H = 2           # number of attention heads
    NUM_NODES = 10
    key = jax.random.PRNGKey(0)
    k_f, k_w, k_bw, k_a, k_ab = jax.random.split(key, 5)

    # node feature table f (synthetic, deterministic)
    f = jax.random.normal(k_f, (NUM_NODES, E), dtype=jnp.float32)

    # graph glue: node x and its neighbors (from triples (x, None, None))
    x = 0
    neighbor_ids = jnp.array([1, 2, 3, 5, 7, 8, 9], dtype=jnp.int32)  # 7 neighbors
    nb = jnp.concatenate([f[x:x + 1, :], f[neighbor_ids, :]], axis=0)  # (8, E)

    # per-head parameters, nn.Linear-style uniform init (deterministic)
    bnd_w = 1.0 / np.sqrt(E)
    bnd_a = 1.0 / np.sqrt(2 * E)
    W = jax.random.uniform(k_w, (H, E, E), jnp.float32, -bnd_w, bnd_w)
    bw = jax.random.uniform(k_bw, (H, E), jnp.float32, -bnd_w, bnd_w)
    aw = jax.random.uniform(k_a, (H, 2 * E), jnp.float32, -bnd_a, bnd_a)
    ab = jax.random.uniform(k_ab, (H,), jnp.float32, -bnd_a, bnd_a)

    out = gat_forward(nb, W, bw, aw, ab)
    out = jax.block_until_ready(out)

    ref = gat_reference(nb, W, bw, aw, ab)
    np.testing.assert_allclose(np.asarray(out), np.asarray(ref),
                               rtol=1e-5, atol=1e-5)
    assert out.shape == (1, E) and out.dtype == jnp.float32
    print("KERNEL_OK")
</pallas_src>

<mosaic_0001>
module attributes {stable_mosaic.version = 11 : i64} {
  func.func @gat_kernel(%arg0: memref<8x32xf32, #tpu.memory_space<vmem>>, %arg1: memref<32x64xf32, #tpu.memory_space<vmem>>, %arg2: memref<1x64xf32, #tpu.memory_space<vmem>>, %arg3: memref<64x2xf32, #tpu.memory_space<vmem>>, %arg4: memref<64x2xf32, #tpu.memory_space<vmem>>, %arg5: memref<1x2xf32, #tpu.memory_space<vmem>>, %arg6: memref<1x32xf32, #tpu.memory_space<vmem>>) attributes {dimension_semantics = [], scalar_prefetch = 0 : i64, scratch_operands = 0 : i64, tpu.core_type = #tpu.core_type<tc>} {
    %c0 = arith.constant 0 : index
    %c0_0 = arith.constant 0 : index
    %0 = vector.load %arg0[%c0, %c0_0] : memref<8x32xf32, #tpu.memory_space<vmem>>, vector<8x32xf32>
    %c0_1 = arith.constant 0 : index
    %c0_2 = arith.constant 0 : index
    %1 = vector.load %arg1[%c0_1, %c0_2] : memref<32x64xf32, #tpu.memory_space<vmem>>, vector<32x64xf32>
    %c0_3 = arith.constant 0 : index
    %c0_4 = arith.constant 0 : index
    %2 = vector.load %arg2[%c0_3, %c0_4] : memref<1x64xf32, #tpu.memory_space<vmem>>, vector<1x64xf32>
    %c0_5 = arith.constant 0 : index
    %c0_6 = arith.constant 0 : index
    %3 = vector.load %arg3[%c0_5, %c0_6] : memref<64x2xf32, #tpu.memory_space<vmem>>, vector<64x2xf32>
    %c0_7 = arith.constant 0 : index
    %c0_8 = arith.constant 0 : index
    %4 = vector.load %arg4[%c0_7, %c0_8] : memref<64x2xf32, #tpu.memory_space<vmem>>, vector<64x2xf32>
    %c0_9 = arith.constant 0 : index
    %c0_10 = arith.constant 0 : index
    %5 = vector.load %arg5[%c0_9, %c0_10] : memref<1x2xf32, #tpu.memory_space<vmem>>, vector<1x2xf32>
    %cst = arith.constant dense<0.000000e+00> : vector<8x64xf32>
    %6 = tpu.matmul %0, %1, %cst {dimension_numbers = #tpu.dot_dimension_numbers<[1], [0], [0], [1], [0, 0, 1, 1], [], []>} : vector<8x32xf32>, vector<32x64xf32>, vector<8x64xf32> -> vector<8x64xf32>
    %7 = vector.broadcast %2 : vector<1x64xf32> to vector<8x64xf32>
    %8 = arith.addf %6, %7 : vector<8x64xf32>
    %9 = vector.extract_strided_slice %8 {offsets = [0, 0], sizes = [1, 64], strides = [1, 1]} : vector<8x64xf32> to vector<1x64xf32>
    %cst_11 = arith.constant dense<0.000000e+00> : vector<8x2xf32>
    %10 = tpu.matmul %8, %4, %cst_11 {dimension_numbers = #tpu.dot_dimension_numbers<[1], [0], [0], [1], [0, 0, 1, 1], [], []>} : vector<8x64xf32>, vector<64x2xf32>, vector<8x2xf32> -> vector<8x2xf32>
    %cst_12 = arith.constant dense<0.000000e+00> : vector<1x2xf32>
    %11 = tpu.matmul %9, %3, %cst_12 {dimension_numbers = #tpu.dot_dimension_numbers<[1], [0], [0], [1], [0, 0, 1, 1], [], []>} : vector<1x64xf32>, vector<64x2xf32>, vector<1x2xf32> -> vector<1x2xf32>
    %12 = vector.broadcast %11 : vector<1x2xf32> to vector<8x2xf32>
    %13 = arith.addf %10, %12 : vector<8x2xf32>
    %14 = vector.broadcast %5 : vector<1x2xf32> to vector<8x2xf32>
    %15 = arith.addf %13, %14 : vector<8x2xf32>
    %cst_13 = arith.constant 0.000000e+00 : f32
    %16 = vector.broadcast %cst_13 : f32 to vector<8x2xf32>
    %17 = arith.cmpf ogt, %15, %16 : vector<8x2xf32>
    %cst_14 = arith.constant 2.000000e-01 : f32
    %18 = vector.broadcast %cst_14 : f32 to vector<8x2xf32>
    %19 = arith.mulf %18, %15 : vector<8x2xf32>
    %20 = arith.select %17, %15, %19 : vector<8x2xi1>, vector<8x2xf32>
    %cst_15 = arith.constant dense<0.000000e+00> : vector<8xf32>
    %21 = vector.multi_reduction <add>, %20, %cst_15 [1] : vector<8x2xf32> to vector<8xf32>
    %22 = vector.shape_cast %21 : vector<8xf32> to vector<8x1xf32>
    %23 = vector.broadcast %22 : vector<8x1xf32> to vector<8x32xf32>
    %24 = arith.mulf %23, %0 : vector<8x32xf32>
    %cst_16 = arith.constant dense<0.000000e+00> : vector<32xf32>
    %25 = vector.multi_reduction <add>, %24, %cst_16 [0] : vector<8x32xf32> to vector<32xf32>
    %26 = vector.shape_cast %25 : vector<32xf32> to vector<1x32xf32>
    %cst_17 = arith.constant 5.000000e-01 : f32
    %27 = vector.broadcast %cst_17 : f32 to vector<1x32xf32>
    %28 = arith.mulf %26, %27 : vector<1x32xf32>
    %c0_18 = arith.constant 0 : index
    %c0_19 = arith.constant 0 : index
    %29 = vector.load %arg6[%c0_18, %c0_19] : memref<1x32xf32, #tpu.memory_space<vmem>>, vector<1x32xf32>
    tpu.vector_store %arg6[%c0_18, %c0_19], %28 {strides = array<i32>} : memref<1x32xf32, #tpu.memory_space<vmem>>, vector<1x32xf32>,
    return
  }
}

</mosaic_0001>

<llo_original>
// kernel: tpu_custom_call.1
$region0: #{tpu_custom_call.1}
  #allocation0 [shape = 'u32[]', space=smem, size = 0x4, offset = 0x4, fixed_abs, tag = 'smem constant byte address 0x4 - core index']
  #allocation1 [shape = 'u32[72,128]{1,0:T(1,128)}', space=vmem, size = 0x9000, scoped, tag = 'internal scratch']
  %s0 = inlined_call_operand.vmem [shape: f32[8,32], index: 0, kind: input, shape index: {}]
  %s1 = inlined_call_operand.vmem [shape: f32[32,64], index: 1, kind: input, shape index: {}]
  %s2 = inlined_call_operand.vmem [shape: f32[1,64], index: 2, kind: input, shape index: {}]
  %s3 = inlined_call_operand.vmem [shape: f32[64,2], index: 3, kind: input, shape index: {}]
  %s4 = inlined_call_operand.vmem [shape: f32[64,2], index: 4, kind: input, shape index: {}]
  %s5 = inlined_call_operand.vmem [shape: f32[1,2], index: 5, kind: input, shape index: {}]
  %s6 = inlined_call_operand.hbm [shape: f32[1,32], index: 6, kind: output, shape index: {}]
  %s7 = sld [smem:[#allocation0]]
  $region34: #{tpu_custom_call.1} parent=0
    _
  %s9 = ssub.s32 1, %s7
  %s10 = scalar_select 0, %s9, %s7
  $region1: #{tpu_custom_call.1} parent=0
    #allocation2 [shape = 'u8[512]{0}', space=vmem, size = 0x400, scoped, tag = 'output window, operand 0, single buffered']
    #allocation3 [shape = 's32[1]{0}', space=sflag, size = 0x4, scoped, tag = 'scoped memory for tpu_custom_call.1']
    %11 = vsyncpa [#allocation3], 0
    // Predicated region
    $region2: #{tpu_custom_call.1} parent=1 // pred_check
      _
    $region3: #{tpu_custom_call.1} parent=1 // pred_check_branch
      %13 = sbr.rel (0) target = $region5
    $region4: #{tpu_custom_call.1} parent=1 // pred_region
      _
    $region5: #{tpu_custom_call.1} parent=1 // pred_fallthru
      _
    // Predicated region
    $region6: #{tpu_custom_call.1} parent=1 // pred_check
      _
    $region7: #{tpu_custom_call.1} parent=1 // pred_check_branch
      %15 = sbr.rel (0) target = $region9
    $region8: #{tpu_custom_call.1} parent=1 // pred_region
      _
    $region9: #{tpu_custom_call.1} parent=1 // pred_fallthru
      _
    // Predicated region
    $region10: #{tpu_custom_call.1} parent=1 // pred_check
      _
    $region11: #{tpu_custom_call.1} parent=1 // pred_check_branch
      %17 = sbr.rel (0) target = $region13
    $region12: #{tpu_custom_call.1} parent=1 // pred_region
      _
    $region13: #{tpu_custom_call.1} parent=1 // pred_fallthru
      _
    // Predicated region
    $region14: #{tpu_custom_call.1} parent=1 // pred_check
      _
    $region15: #{tpu_custom_call.1} parent=1 // pred_check_branch
      %19 = sbr.rel (0) target = $region17
    $region16: #{tpu_custom_call.1} parent=1 // pred_region
      _
    $region17: #{tpu_custom_call.1} parent=1 // pred_fallthru
      _
    // Predicated region
    $region18: #{tpu_custom_call.1} parent=1 // pred_check
      _
    $region19: #{tpu_custom_call.1} parent=1 // pred_check_branch
      %21 = sbr.rel (0) target = $region21
    $region20: #{tpu_custom_call.1} parent=1 // pred_region
      _
    $region21: #{tpu_custom_call.1} parent=1 // pred_fallthru
      _
    // Predicated region
    $region22: #{tpu_custom_call.1} parent=1 // pred_check
      _
    $region23: #{tpu_custom_call.1} parent=1 // pred_check_branch
      %23 = sbr.rel (0) target = $region25
    $region24: #{tpu_custom_call.1} parent=1 // pred_region
      _
    $region25: #{tpu_custom_call.1} parent=1 // pred_fallthru
      _
    %v24 = vld [vmem:[%s0] sm:$0xff]
    %v25 = vld [vmem:[%s1] sm:$0xff]
    %v26 = vld [vmem:[%s1 + $0x8] sm:$0xff]
    %v27 = vld [vmem:[%s1 + $0x10] sm:$0xff]
    %v28 = vld [vmem:[%s1 + $0x18] sm:$0xff]
    %v29 = vld [vmem:[%s2] sm:$0x1]
    %v30 = vld [vmem:[%s3] sm:$0xff]
    %v31 = vld [vmem:[%s3 + $0x8] sm:$0xff]
    %v32 = vld [vmem:[%s3 + $0x10] sm:$0xff]
    %v33 = vld [vmem:[%s3 + $0x18] sm:$0xff]
    %v34 = vld [vmem:[%s3 + $0x20] sm:$0xff]
    %v35 = vld [vmem:[%s3 + $0x28] sm:$0xff]
    %v36 = vld [vmem:[%s3 + $0x30] sm:$0xff]
    %v37 = vld [vmem:[%s3 + $0x38] sm:$0xff]
    %v38 = vld [vmem:[%s4] sm:$0xff]
    %v39 = vld [vmem:[%s4 + $0x8] sm:$0xff]
    %v40 = vld [vmem:[%s4 + $0x10] sm:$0xff]
    %v41 = vld [vmem:[%s4 + $0x18] sm:$0xff]
    %v42 = vld [vmem:[%s4 + $0x20] sm:$0xff]
    %v43 = vld [vmem:[%s4 + $0x28] sm:$0xff]
    %v44 = vld [vmem:[%s4 + $0x30] sm:$0xff]
    %v45 = vld [vmem:[%s4 + $0x38] sm:$0xff]
    %v46 = vld [vmem:[%s5] sm:$0x1]
    %v48 = vperm.slane %v29, 0
    %vm50 = vcmask 261120
    %v52 = vsel %vm50, %v24, 0
    %54 = vmatpush.msra.mxu0 0.0
    %55 = vmatpush.msra.mxu0 0.0
    %56 = vmatpush.msra.mxu0 0.0
    %57 = vmatpush.msra.mxu0 0.0
    %58 = vmatpush.msra.mxu0 0.0
    %59 = vmatpush.msra.mxu0 0.0
    %60 = vmatpush.msra.mxu0 0.0
    %61 = vmatpush.msra.mxu0 0.0
    %62 = vmatpush.msra.mxu0 0.0
    %63 = vmatpush.msra.mxu0 0.0
    %64 = vmatpush.msra.mxu0 0.0
    %65 = vmatpush.msra.mxu0 0.0
    %66 = vmatpush.msra.mxu0 %v28
    %67 = vmatpush.msra.mxu0 %v27
    %68 = vmatpush.msra.mxu0 %v26
    %69 = vmatpush.msra.mxu0 %v25
    %70 = vmatmul.f32.gmra.mxu0 %v52
    %v71 = vpop.f32.mrf.mxu0
    %v72 = vadd.f32 %v48, %v71
    %73 = vdwg.mxu0
    %vm74 = vcmask 523264
    %v76 = vsel %vm74, %v72, 0
    %78 = vmatpush.msra.mxu0 0.0
    %79 = vmatpush.msra.mxu0 0.0
    %80 = vmatpush.msra.mxu0 0.0
    %81 = vmatpush.msra.mxu0 0.0
    %82 = vmatpush.msra.mxu0 0.0
    %83 = vmatpush.msra.mxu0 0.0
    %84 = vmatpush.msra.mxu0 0.0
    %85 = vmatpush.msra.mxu0 0.0
    %86 = vmatpush.msra.mxu0 %v37
    %87 = vmatpush.msra.mxu0 %v36
    %88 = vmatpush.msra.mxu0 %v35
    %89 = vmatpush.msra.mxu0 %v34
    %90 = vmatpush.msra.mxu0 %v33
    %91 = vmatpush.msra.mxu0 %v32
    %92 = vmatpush.msra.mxu0 %v31
    %93 = vmatpush.msra.mxu0 %v30
    %94 = vmatmul.f32.gmra.mxu0 %v76
    %v95 = vpop.f32.mrf.mxu0
    %v96 = vadd.f32 0.0, %v95
    %97 = vdwg.mxu0
    %v98 = vperm.slane %v96, 0
    %99 = vmatpush.msra.mxu0 0.0
    %100 = vmatpush.msra.mxu0 0.0
    %101 = vmatpush.msra.mxu0 0.0
    %102 = vmatpush.msra.mxu0 0.0
    %103 = vmatpush.msra.mxu0 0.0
    %104 = vmatpush.msra.mxu0 0.0
    %105 = vmatpush.msra.mxu0 0.0
    %106 = vmatpush.msra.mxu0 0.0
    %107 = vmatpush.msra.mxu0 %v45
    %108 = vmatpush.msra.mxu0 %v44
    %109 = vmatpush.msra.mxu0 %v43
    %110 = vmatpush.msra.mxu0 %v42
    %111 = vmatpush.msra.mxu0 %v41
    %112 = vmatpush.msra.mxu0 %v40
    %113 = vmatpush.msra.mxu0 %v39
    %114 = vmatpush.msra.mxu0 %v38
    %115 = vmatmul.f32.gmra.mxu0 %v76
    %v116 = vpop.f32.mrf.mxu0
    %v117 = vadd.f32 %v98, %v116
    %118 = vdwg.mxu0
    %v120 = vperm.slane %v46, 0
    %v122 = vadd.f32 %v117, %v120
    %vm123 = vcmp.gt.f32.partialorder %v122, 0.0
    %v124 = vmul.f32 %v122, 0.2
    %v125 = vsel %vm123, %v122, %v124
    %vm126 = vcmask 15360
    %v127 = vsel %vm126, %v125, 0.0
    %128 = vadd.xlane.f32.xlu0 %v127
    %v129 = vpop.xlane.xlu0 %128
    %v130 = vmul.f32 %v129, %v24
    %v131 = vsel %vm50, %v130, 0.0
    %v132 = vrot.slane %v131, 4
    %v133 = vadd.f32 %v131, %v132
    %v134 = vrot.slane %v133, 2
    %v135 = vadd.f32 %v133, %v134
    %v136 = vrot.slane %v135, 1
    %v137 = vadd.f32 %v135, %v136
    %v138 = vmul.f32 %v137, 0.5
    %vm139 = vcmask 253952
    %140 = vst.msk [vmem:[#allocation2] sm:$0x1] %vm139, %v138
    // Predicated region
    $region26: #{tpu_custom_call.1} parent=1 // pred_check
      _
    $region27: #{tpu_custom_call.1} parent=1 // pred_check_branch
      %142 = sbr.rel (0) target = $region29
    $region28: #{tpu_custom_call.1} parent=1 // pred_region
      %144 = vsyncadd [#allocation3], 0
      %s146 = sshll.u32 [#allocation2], 4
      %s147 = int_to_ptr.vmem [resolvable:$true] %s146
      %s148 = sshll.u32 %s6, 4
      %s149 = int_to_ptr.hbm [resolvable:$true] %s148
      %151 = dma.vmem_to_hbm [thread:$0]  %s147, 16, %s149, [#allocation3]
    $region29: #{tpu_custom_call.1} parent=1 // pred_fallthru
      _
    // Predicated region
    $region30: #{tpu_custom_call.1} parent=1 // pred_check
      _
    $region31: #{tpu_custom_call.1} parent=1 // pred_check_branch
      %153 = sbr.rel (0) target = $region33
    $region32: #{tpu_custom_call.1} parent=1 // pred_region
      %155 = dma.done [#allocation3], 16
    $region33: #{tpu_custom_call.1} parent=1 // pred_fallthru
      _
    %156 = vsyncpa [#allocation3], 1

</llo_original>
